<compile_context>
chip_gen: v5e
topology: v5e:2x2
jax: 0.10.0
libtpu: 0.0.40
codegen_flags: <defaults>
</compile_context>

<pallas_src>
import jax
import jax.numpy as jnp
from jax.experimental import pallas as pl
from jax.experimental.pallas import tpu as pltpu

LANE = 128              # TPU lane width: keep last dims of stored tiles lane-dense.
TILE_B = 512            # batch tile; 512 rows hides per-grid-step overhead (~0.35 us)
PALLAS_MIN_BATCH = 128  # below this a fused XLA dot beats a Pallas launch


def _round_up(n, m):
    return ((n + m - 1) // m) * m


def _mlp_encoder_kernel(x_ref, w1_ref, b1_ref, w2_ref, b2_ref, y_ref):
    """One (TILE_B, D) batch tile:  y = relu(x @ W1 + b1) @ W2 + b2.

    x/W1/W2 are bf16 (MXU-native, half the HBM traffic); accumulation and the
    bias/ReLU elementwise path are f32.  All tiles are lane-dense (last dim
    128 or the full array dim), so the output store is an unmasked vst.
    """
    x = x_ref[...]                                                    # (TILE_B, D) bf16
    h = jnp.dot(x, w1_ref[...], preferred_element_type=jnp.float32)   # (TILE_B, Hp) f32
    h = jnp.maximum(h + b1_ref[...], 0.0)                             # bias + ReLU in f32
    y = jnp.dot(h.astype(w2_ref.dtype), w2_ref[...],
                preferred_element_type=jnp.float32)                   # (TILE_B, Cp) f32
    y_ref[...] = (y + b2_ref[...]).astype(y_ref.dtype)                # lane-dense store


def mlp_encoder_pallas(x, w1_pad, b1_pad, w2_pad, b2_pad, *, tile_b=TILE_B):
    """Pallas encoder over padded params.

    x        : (B, D)       f32 (cast to bf16 here)
    w1_pad   : (D, Hp)      Hp = round_up(hidden, 128), zero-padded columns
    b1_pad   : (1, Hp)      f32
    w2_pad   : (Hp, Cp)     Cp = 128, zero-padded rows/columns
    b2_pad   : (1, Cp)      f32
    returns  : (B, Cp)      f32   (caller slices [:, :nr_classes])
    """
    B, D = x.shape
    Hp = w1_pad.shape[1]
    Cp = w2_pad.shape[1]

    # Pad the batch to a multiple of the tile so every grid step is full.
    b_pad = _round_up(max(B, tile_b), tile_b)
    if b_pad != B:
        x = jnp.pad(x, ((0, b_pad - B), (0, 0)))

    x_bf = x.astype(jnp.bfloat16)
    w1_bf = w1_pad.astype(jnp.bfloat16)
    w2_bf = w2_pad.astype(jnp.bfloat16)

    grid = (b_pad // tile_b,)

    out = pl.pallas_call(
        _mlp_encoder_kernel,
        out_shape=jax.ShapeDtypeStruct((b_pad, Cp), jnp.float32),
        grid_spec=pltpu.PrefetchScalarGridSpec(
            num_scalar_prefetch=0,
            grid=grid,
            in_specs=[
                # x tile streams per grid step (auto double-buffered).
                pl.BlockSpec((tile_b, D), lambda i: (i, 0)),
                # Weights / biases: constant block index -> resident in VMEM.
                pl.BlockSpec((D, Hp), lambda i: (0, 0)),
                pl.BlockSpec((1, Hp), lambda i: (0, 0)),
                pl.BlockSpec((Hp, Cp), lambda i: (0, 0)),
                pl.BlockSpec((1, Cp), lambda i: (0, 0)),
            ],
            out_specs=pl.BlockSpec((tile_b, Cp), lambda i: (i, 0)),
        ),
        compiler_params=pltpu.CompilerParams(
            # Batch tiles are independent -> shard across both TCs on v7x.
            dimension_semantics=("parallel",),
        ),
    )(x_bf, w1_bf, b1_pad, w2_bf, b2_pad)

    return out[:B]


class XORnnPallas:
    """JAX/Pallas re-implementation of the XORnn forward pass."""

    N_FACTS = 2
    N_IMAGES = 4
    N_PREDICATES = 2

    def __init__(self, in_dim=8, hidden=32, nr_classes=2, key=None,
                 tile_b=TILE_B, pallas_min_batch=PALLAS_MIN_BATCH):
        if key is None:
            key = jax.random.PRNGKey(0)
        k1, k2, k3, k4 = jax.random.split(key, 4)

        self.in_dim = in_dim
        self.hidden = hidden
        self.nr_classes = nr_classes
        self.tile_b = tile_b
        self.pallas_min_batch = pallas_min_batch

        # Logical (unpadded) parameters — the reference semantics.
        self.w1 = (jax.random.normal(k1, (in_dim, hidden), jnp.float32)
                   * (1.0 / jnp.sqrt(in_dim)))
        self.b1 = jax.random.normal(k2, (1, hidden), jnp.float32) * 0.01
        self.w2 = (jax.random.normal(k3, (hidden, nr_classes), jnp.float32)
                   * (1.0 / jnp.sqrt(hidden)))
        self.b2 = jax.random.normal(k4, (1, nr_classes), jnp.float32) * 0.01

        # Lane-dense padded copies for the Pallas kernel.  Zero padding is
        # numerically inert: padded hidden units see zero weight & bias, so
        # relu(0)=0 contributes nothing; padded class lanes are sliced off.
        hp = _round_up(hidden, LANE)
        cp = _round_up(nr_classes, LANE)
        self.hp, self.cp = hp, cp
        self.w1_pad = jnp.zeros((in_dim, hp), jnp.float32).at[:, :hidden].set(self.w1)
        self.b1_pad = jnp.zeros((1, hp), jnp.float32).at[:, :hidden].set(self.b1)
        self.w2_pad = jnp.zeros((hp, cp), jnp.float32).at[:hidden, :nr_classes].set(self.w2)
        self.b2_pad = jnp.zeros((1, cp), jnp.float32).at[:, :nr_classes].set(self.b2)

    # ----- encoder (self.net equivalent) -----------------------------------
    def encode(self, x, force_pallas=False):
        B = x.shape[0]
        if (not force_pallas) and B < self.pallas_min_batch:
            # Tiny batch: Pallas launch overhead dominates; let XLA fuse it.
            h = jnp.maximum(x @ self.w1 + self.b1, 0.0)
            return h @ self.w2 + self.b2
        y = mlp_encoder_pallas(x, self.w1_pad, self.b1_pad,
                               self.w2_pad, self.b2_pad, tile_b=self.tile_b)
        return y[:, :self.nr_classes]

    # ----- XORnn.forward ----------------------------------------------------
    def __call__(self, x, force_pallas=False):
        B = x.shape[0]
        # Constant outputs (pure fills; no compute worth a kernel).
        cs = jnp.full((B, self.N_IMAGES, self.N_FACTS), -1.0, dtype=jnp.float32)
        preds = jnp.full((B, self.N_IMAGES, self.N_PREDICATES), -1.0, dtype=jnp.float32)
        pcs = jnp.full((B, self.N_IMAGES, self.N_FACTS),
                       1.0 / self.N_FACTS, dtype=jnp.float32)
        py = self.encode(x, force_pallas=force_pallas)
        return {"CS": cs, "YS": py, "pCS": pcs, "PREDS": preds}


def _ref_encoder_f32(x, w1, b1, w2, b2):
    return jnp.maximum(x @ w1 + b1, 0.0) @ w2 + b2


def _ref_encoder_bf16(x, w1, b1, w2, b2):
    """Reference matching the kernel's bf16-storage / f32-accumulate scheme."""
    f32 = jnp.float32
    xb = x.astype(jnp.bfloat16).astype(f32)
    w1b = w1.astype(jnp.bfloat16).astype(f32)
    w2b = w2.astype(jnp.bfloat16).astype(f32)
    h = jnp.maximum(xb @ w1b + b1, 0.0)
    hb = h.astype(jnp.bfloat16).astype(f32)
    return hb @ w2b + b2


if __name__ == "__main__":
    key = jax.random.PRNGKey(0)
    k_small, k_big, k_params = jax.random.split(key, 3)

    D, H, C = 8, 32, 2
    model = XORnnPallas(in_dim=D, hidden=H, nr_classes=C, key=k_params)

    # --- small batch (B=2): forward semantics; dispatches to the fused XLA path
    B_small = 2
    x_small = jax.random.normal(k_small, (B_small, D), jnp.float32)
    out_small = model(x_small)
    jax.block_until_ready(out_small)

    assert out_small["CS"].shape == (B_small, 4, 2) and bool(jnp.all(out_small["CS"] == -1.0))
    assert out_small["PREDS"].shape == (B_small, 4, 2) and bool(jnp.all(out_small["PREDS"] == -1.0))
    assert out_small["pCS"].shape == (B_small, 4, 2) and bool(jnp.all(out_small["pCS"] == 0.5))
    assert out_small["YS"].shape == (B_small, C)
    ref_small = _ref_encoder_f32(x_small, model.w1, model.b1, model.w2, model.b2)
    assert bool(jnp.allclose(out_small["YS"], ref_small, atol=1e-5, rtol=1e-5))

    # --- larger batch: exercises the tiled Pallas path (2 grid steps @ TILE_B=512)
    B_big = 1024
    x_big = jax.random.normal(k_big, (B_big, D), jnp.float32)
    out_big = model(x_big)          # B_big >= PALLAS_MIN_BATCH -> Pallas kernel
    jax.block_until_ready(out_big)

    assert out_big["YS"].shape == (B_big, C)
    ref_big = _ref_encoder_bf16(x_big, model.w1, model.b1, model.w2, model.b2)
    assert bool(jnp.allclose(out_big["YS"], ref_big, atol=1e-3, rtol=1e-3))

    # Also check a batch that is NOT a multiple of the tile (padding path).
    B_ragged = 700
    x_ragged = x_big[:B_ragged]
    y_ragged = model.encode(x_ragged, force_pallas=True)
    jax.block_until_ready(y_ragged)
    assert y_ragged.shape == (B_ragged, C)
    assert bool(jnp.allclose(y_ragged, ref_big[:B_ragged], atol=1e-3, rtol=1e-3))

    print("KERNEL_OK")
</pallas_src>

<mosaic_0001>
module attributes {stable_mosaic.version = 11 : i64} {
  func.func @_mlp_encoder_kernel(%arg0: i32, %arg1: memref<512x8xbf16, #tpu.memory_space<vmem>>, %arg2: memref<8x128xbf16, #tpu.memory_space<vmem>>, %arg3: memref<1x128xf32, #tpu.memory_space<vmem>>, %arg4: memref<128x128xbf16, #tpu.memory_space<vmem>>, %arg5: memref<1x128xf32, #tpu.memory_space<vmem>>, %arg6: memref<512x128xf32, #tpu.memory_space<vmem>>) attributes {dimension_semantics = [#tpu.dimension_semantics<parallel>], iteration_bounds = array<i64: 2>, scalar_prefetch = 0 : i64, scratch_operands = 0 : i64, tpu.core_type = #tpu.core_type<tc>, window_params = [{transform_indices = @transform_0, window_bounds = array<i64: 512, 8>}, {pipeline_mode = #tpu.pipeline_mode<synchronous>, transform_indices = @transform_1, window_bounds = array<i64: 8, 128>}, {pipeline_mode = #tpu.pipeline_mode<synchronous>, transform_indices = @transform_2, window_bounds = array<i64: 1, 128>}, {pipeline_mode = #tpu.pipeline_mode<synchronous>, transform_indices = @transform_3, window_bounds = array<i64: 128, 128>}, {pipeline_mode = #tpu.pipeline_mode<synchronous>, transform_indices = @transform_4, window_bounds = array<i64: 1, 128>}, {transform_indices = @transform_5, window_bounds = array<i64: 512, 128>}]} {
    %c0 = arith.constant 0 : index
    %c0_0 = arith.constant 0 : index
    %0 = vector.load %arg1[%c0, %c0_0] : memref<512x8xbf16, #tpu.memory_space<vmem>>, vector<512x8xbf16>
    %c0_1 = arith.constant 0 : index
    %c0_2 = arith.constant 0 : index
    %1 = vector.load %arg2[%c0_1, %c0_2] : memref<8x128xbf16, #tpu.memory_space<vmem>>, vector<8x128xbf16>
    %cst = arith.constant dense<0.000000e+00> : vector<512x128xf32>
    %2 = tpu.matmul %0, %1, %cst {dimension_numbers = #tpu.dot_dimension_numbers<[1], [0], [0], [1], [0, 0, 1, 1], [], []>} : vector<512x8xbf16>, vector<8x128xbf16>, vector<512x128xf32> -> vector<512x128xf32>
    %c0_3 = arith.constant 0 : index
    %c0_4 = arith.constant 0 : index
    %3 = vector.load %arg3[%c0_3, %c0_4] : memref<1x128xf32, #tpu.memory_space<vmem>>, vector<1x128xf32>
    %4 = vector.broadcast %3 : vector<1x128xf32> to vector<512x128xf32>
    %5 = arith.addf %2, %4 : vector<512x128xf32>
    %cst_5 = arith.constant 0.000000e+00 : f32
    %6 = vector.broadcast %cst_5 : f32 to vector<512x128xf32>
    %7 = arith.maximumf %5, %6 : vector<512x128xf32>
    %8 = arith.truncf %7 : vector<512x128xf32> to vector<512x128xbf16>
    %c0_6 = arith.constant 0 : index
    %c0_7 = arith.constant 0 : index
    %9 = vector.load %arg4[%c0_6, %c0_7] : memref<128x128xbf16, #tpu.memory_space<vmem>>, vector<128x128xbf16>
    %cst_8 = arith.constant dense<0.000000e+00> : vector<512x128xf32>
    %10 = tpu.matmul %8, %9, %cst_8 {dimension_numbers = #tpu.dot_dimension_numbers<[1], [0], [0], [1], [0, 0, 1, 1], [], []>} : vector<512x128xbf16>, vector<128x128xbf16>, vector<512x128xf32> -> vector<512x128xf32>
    %c0_9 = arith.constant 0 : index
    %c0_10 = arith.constant 0 : index
    %11 = vector.load %arg5[%c0_9, %c0_10] : memref<1x128xf32, #tpu.memory_space<vmem>>, vector<1x128xf32>
    %12 = vector.broadcast %11 : vector<1x128xf32> to vector<512x128xf32>
    %13 = arith.addf %10, %12 : vector<512x128xf32>
    %c0_11 = arith.constant 0 : index
    %c0_12 = arith.constant 0 : index
    %14 = vector.load %arg6[%c0_11, %c0_12] : memref<512x128xf32, #tpu.memory_space<vmem>>, vector<512x128xf32>
    tpu.vector_store %arg6[%c0_11, %c0_12], %13 {strides = array<i32>} : memref<512x128xf32, #tpu.memory_space<vmem>>, vector<512x128xf32>,
    return
  }
  func.func @transform_0(%arg0: i32) -> (i32, i32) {
    %c0_i32 = arith.constant 0 : i32
    %c0_i32_0 = arith.constant 0 : i32
    return %arg0, %c0_i32 : i32, i32
  }
  func.func @transform_1(%arg0: i32) -> (i32, i32) {
    %c0_i32 = arith.constant 0 : i32
    %c0_i32_0 = arith.constant 0 : i32
    %c0_i32_1 = arith.constant 0 : i32
    return %c0_i32, %c0_i32_0 : i32, i32
  }
  func.func @transform_2(%arg0: i32) -> (i32, i32) {
    %c0_i32 = arith.constant 0 : i32
    %c0_i32_0 = arith.constant 0 : i32
    %c0_i32_1 = arith.constant 0 : i32
    return %c0_i32, %c0_i32_0 : i32, i32
  }
  func.func @transform_3(%arg0: i32) -> (i32, i32) {
    %c0_i32 = arith.constant 0 : i32
    %c0_i32_0 = arith.constant 0 : i32
    %c0_i32_1 = arith.constant 0 : i32
    return %c0_i32, %c0_i32_0 : i32, i32
  }
  func.func @transform_4(%arg0: i32) -> (i32, i32) {
    %c0_i32 = arith.constant 0 : i32
    %c0_i32_0 = arith.constant 0 : i32
    %c0_i32_1 = arith.constant 0 : i32
    return %c0_i32, %c0_i32_0 : i32, i32
  }
  func.func @transform_5(%arg0: i32) -> (i32, i32) {
    %c0_i32 = arith.constant 0 : i32
    %c0_i32_0 = arith.constant 0 : i32
    return %arg0, %c0_i32 : i32, i32
  }
}

</mosaic_0001>

<llo_original>
// kernel: tpu_custom_call.1
$region0: #{tpu_custom_call.1}
  #allocation0 [shape = 'u32[]', space=smem, size = 0x4, offset = 0x4, fixed_abs, tag = 'smem constant byte address 0x4 - core index']
  #allocation1 [shape = 'u32[72,128]{1,0:T(1,128)}', space=vmem, size = 0x9000, scoped, tag = 'internal scratch']
  %s0 = inlined_call_operand.vmem [shape: bf16[1024,8], index: 0, kind: input, shape index: {}]
  %s1 = inlined_call_operand.vmem [shape: bf16[8,128], index: 1, kind: input, shape index: {}]
  %s2 = inlined_call_operand.vmem [shape: f32[1,128], index: 2, kind: input, shape index: {}]
  %s3 = inlined_call_operand.vmem [shape: bf16[128,128], index: 3, kind: input, shape index: {}]
  %s4 = inlined_call_operand.vmem [shape: f32[1,128], index: 4, kind: input, shape index: {}]
  %s5 = inlined_call_operand.hbm [shape: f32[1024,128], index: 5, kind: output, shape index: {}]
  %s6 = sld [smem:[#allocation0]]
  $region53: #{tpu_custom_call.1} parent=0
    _
  %s8 = ssub.s32 1, %s6
  %s9 = scalar_select 0, %s8, %s6
  $region1: #{tpu_custom_call.1} parent=0
    #allocation2 [shape = 'u8[524288]{0}', space=vmem, size = 0x80000, scoped, tag = 'output window, operand 0']
    #allocation3 [shape = 's32[2]{0}', space=sflag, size = 0x8, scoped, tag = 'scoped memory for tpu_custom_call.1']
    %10 = vsyncpa [#allocation3], 0
    %s11 = scalar_lea.sflag [#allocation3], 1
    %12 = vsyncpa %s11, 0
    loop: start=0, step=1, limit=4
    $region2: #{tpu_custom_call.1} parent=1 // loop_pre_header
      _
    $region3: #{tpu_custom_call.1} parent=1 // loop_header
      %s14 = sphi 0, %s18
      %p15 = scmp.ge.s32.totalorder %s14, 4
      %s24 = sphi 0, %s26
      %s27 = sphi 0, %s24
      %s28 = sphi 0, %s27
      %s44 = sphi 0, %s28
      %s48 = sphi 0, %s48
      %s50 = sphi 0, %s48
      %s51 = sphi 0, %s50
      %s65 = sphi 0, %s51
      %s69 = sphi 0, %s69
      %s71 = sphi 0, %s69
      %s72 = sphi 0, %s71
      %s86 = sphi 0, %s72
      %s90 = sphi 0, %s90
      %s92 = sphi 0, %s90
      %s93 = sphi 0, %s92
      %s107 = sphi 0, %s93
      %s111 = sphi 0, %s111
      %s113 = sphi 0, %s111
      %s114 = sphi 0, %s113
      %s128 = sphi 0, %s114
      %s134 = sphi 0, %s136
      %s137 = sphi 0, %s134
      %s138 = sphi 0, %s137
      %s154 = sphi 0, %s138
    $region4: #{tpu_custom_call.1} parent=1 // loop_header_branch
      %17 = sbr.rel (%p15) target = $region8
    $region5: #{tpu_custom_call.1} parent=1 // loop_body
      %s19 = ssub.s32 %s14, 1
      %s20 = ssub.s32 %s14, 2
      %s21 = sadd.s32 %s14, 1
      %s22 = ssub.s32 %s14, %s21
      %p23 = scmp.eq.s32.totalorder %s22, 0
      %s25 = sadd.s32 %s24, 1
      %s26 = scalar_select %p23, %s24, %s25
      %p29 = pneg %p23
      %p30 = scmp.eq.s32.totalorder %s14, 1
      %p31 = por %p29, %p30
      %p32 = scmp.ne.s32.totalorder %s24, %s27
      %p33 = scmp.eq.s32.totalorder %s14, 0
      %p34 = por %p32, %p33
      %p35 = scmp.ne.s32.totalorder %s24, %s27
      %p36 = scmp.eq.s32.totalorder %s19, 1
      %p37 = por %p35, %p36
      %p38 = scmp.ne.s32.totalorder %s27, %s28
      %p39 = scmp.eq.s32.totalorder %s19, 0
      %p40 = por %p38, %p39
      %p41 = scmp.ne.s32.totalorder %s27, %s28
      %p42 = scmp.eq.s32.totalorder %s20, 1
      %p43 = por %p41, %p42
      %p45 = scmp.ne.s32.totalorder %s28, %s44
      %p46 = scmp.eq.s32.totalorder %s20, 0
      %p47 = por %p45, %p46
      %s49 = sadd.s32 %s48, 1
      %p52 = scmp.eq.s32.totalorder %s14, 1
      %p53 = scmp.ne.s32.totalorder %s48, %s50
      %p54 = scmp.eq.s32.totalorder %s14, 0
      %p55 = por %p53, %p54
      %p56 = scmp.ne.s32.totalorder %s48, %s50
      %p57 = scmp.eq.s32.totalorder %s19, 1
      %p58 = por %p56, %p57
      %p59 = scmp.ne.s32.totalorder %s50, %s51
      %p60 = scmp.eq.s32.totalorder %s19, 0
      %p61 = por %p59, %p60
      %p62 = scmp.ne.s32.totalorder %s50, %s51
      %p63 = scmp.eq.s32.totalorder %s20, 1
      %p64 = por %p62, %p63
      %p66 = scmp.ne.s32.totalorder %s51, %s65
      %p67 = scmp.eq.s32.totalorder %s20, 0
      %p68 = por %p66, %p67
      %s70 = sadd.s32 %s69, 1
      %p73 = scmp.eq.s32.totalorder %s14, 1
      %p74 = scmp.ne.s32.totalorder %s69, %s71
      %p75 = scmp.eq.s32.totalorder %s14, 0
      %p76 = por %p74, %p75
      %p77 = scmp.ne.s32.totalorder %s69, %s71
      %p78 = scmp.eq.s32.totalorder %s19, 1
      %p79 = por %p77, %p78
      %p80 = scmp.ne.s32.totalorder %s71, %s72
      %p81 = scmp.eq.s32.totalorder %s19, 0
      %p82 = por %p80, %p81
      %p83 = scmp.ne.s32.totalorder %s71, %s72
      %p84 = scmp.eq.s32.totalorder %s20, 1
      %p85 = por %p83, %p84
      %p87 = scmp.ne.s32.totalorder %s72, %s86
      %p88 = scmp.eq.s32.totalorder %s20, 0
      %p89 = por %p87, %p88
      %s91 = sadd.s32 %s90, 1
      %p94 = scmp.eq.s32.totalorder %s14, 1
      %p95 = scmp.ne.s32.totalorder %s90, %s92
      %p96 = scmp.eq.s32.totalorder %s14, 0
      %p97 = por %p95, %p96
      %p98 = scmp.ne.s32.totalorder %s90, %s92
      %p99 = scmp.eq.s32.totalorder %s19, 1
      %p100 = por %p98, %p99
      %p101 = scmp.ne.s32.totalorder %s92, %s93
      %p102 = scmp.eq.s32.totalorder %s19, 0
      %p103 = por %p101, %p102
      %p104 = scmp.ne.s32.totalorder %s92, %s93
      %p105 = scmp.eq.s32.totalorder %s20, 1
      %p106 = por %p104, %p105
      %p108 = scmp.ne.s32.totalorder %s93, %s107
      %p109 = scmp.eq.s32.totalorder %s20, 0
      %p110 = por %p108, %p109
      %s112 = sadd.s32 %s111, 1
      %p115 = scmp.eq.s32.totalorder %s14, 1
      %p116 = scmp.ne.s32.totalorder %s111, %s113
      %p117 = scmp.eq.s32.totalorder %s14, 0
      %p118 = por %p116, %p117
      %p119 = scmp.ne.s32.totalorder %s111, %s113
      %p120 = scmp.eq.s32.totalorder %s19, 1
      %p121 = por %p119, %p120
      %p122 = scmp.ne.s32.totalorder %s113, %s114
      %p123 = scmp.eq.s32.totalorder %s19, 0
      %p124 = por %p122, %p123
      %p125 = scmp.ne.s32.totalorder %s113, %s114
      %p126 = scmp.eq.s32.totalorder %s20, 1
      %p127 = por %p125, %p126
      %p129 = scmp.ne.s32.totalorder %s114, %s128
      %p130 = scmp.eq.s32.totalorder %s20, 0
      %p131 = por %p129, %p130
      %s132 = ssub.s32 %s14, %s21
      %p133 = scmp.eq.s32.totalorder %s132, 0
      %s135 = sadd.s32 %s134, 1
      %s136 = scalar_select %p133, %s134, %s135
      %p139 = pneg %p133
      %p140 = scmp.eq.s32.totalorder %s14, 1
      %p141 = por %p139, %p140
      %p142 = scmp.ne.s32.totalorder %s134, %s137
      %p143 = scmp.eq.s32.totalorder %s14, 0
      %p144 = por %p142, %p143
      %p145 = scmp.ne.s32.totalorder %s134, %s137
      %p146 = scmp.eq.s32.totalorder %s19, 1
      %p147 = por %p145, %p146
      %p148 = scmp.ne.s32.totalorder %s137, %s138
      %p149 = scmp.eq.s32.totalorder %s19, 0
      %p150 = por %p148, %p149
      %p151 = scmp.ne.s32.totalorder %s137, %s138
      %p152 = scmp.eq.s32.totalorder %s20, 1
      %p153 = por %p151, %p152
      %p155 = scmp.ne.s32.totalorder %s138, %s154
      %p156 = scmp.eq.s32.totalorder %s20, 0
      %p157 = por %p155, %p156
      %p158 = scmp.le.s32.totalorder 1, %s14
      %p159 = scmp.lt.s32.totalorder %s14, 3
      %p160 = pnand %p158, %p159
      %p161 = pneg %p160
      // Predicated region
      $region9: #{tpu_custom_call.1} parent=5 // pred_check
        _
      $region10: #{tpu_custom_call.1} parent=5 // pred_check_branch
        %163 = sbr.rel (%p160) target = $region12
      $region11: #{tpu_custom_call.1} parent=5 // pred_region
        %s164 = ssub.s32 %s14, 1
        // Predicated region
        $region13: #{tpu_custom_call.1} parent=11 // pred_check
          %p165 = pneg %p61
        $region14: #{tpu_custom_call.1} parent=11 // pred_check_branch
          %167 = sbr.rel (%p165) target = $region16
        $region15: #{tpu_custom_call.1} parent=11 // pred_region
          _
        $region16: #{tpu_custom_call.1} parent=11 // pred_fallthru
          _
        // Predicated region
        $region17: #{tpu_custom_call.1} parent=11 // pred_check
          %p168 = pneg %p82
        $region18: #{tpu_custom_call.1} parent=11 // pred_check_branch
          %170 = sbr.rel (%p168) target = $region20
        $region19: #{tpu_custom_call.1} parent=11 // pred_region
          _
        $region20: #{tpu_custom_call.1} parent=11 // pred_fallthru
          _
        // Predicated region
        $region21: #{tpu_custom_call.1} parent=11 // pred_check
          %p171 = pneg %p103
        $region22: #{tpu_custom_call.1} parent=11 // pred_check_branch
          %173 = sbr.rel (%p171) target = $region24
        $region23: #{tpu_custom_call.1} parent=11 // pred_region
          _
        $region24: #{tpu_custom_call.1} parent=11 // pred_fallthru
          _
        // Predicated region
        $region25: #{tpu_custom_call.1} parent=11 // pred_check
          %p174 = pneg %p124
        $region26: #{tpu_custom_call.1} parent=11 // pred_check_branch
          %176 = sbr.rel (%p174) target = $region28
        $region27: #{tpu_custom_call.1} parent=11 // pred_region
          _
        $region28: #{tpu_custom_call.1} parent=11 // pred_fallthru
          _
      $region12: #{tpu_custom_call.1} parent=5 // pred_fallthru
        _
      %p177 = scmp.lt.s32.totalorder %s14, 2
      // Predicated region
      $region29: #{tpu_custom_call.1} parent=5 // pred_check
        %p178 = pneg %p177
      $region30: #{tpu_custom_call.1} parent=5 // pred_check_branch
        %180 = sbr.rel (%p178) target = $region32
      $region31: #{tpu_custom_call.1} parent=5 // pred_region
        // Predicated region
        $region33: #{tpu_custom_call.1} parent=31 // pred_check
          %p181 = pneg %p34
        $region34: #{tpu_custom_call.1} parent=31 // pred_check_branch
          %183 = sbr.rel (%p181) target = $region36
        $region35: #{tpu_custom_call.1} parent=31 // pred_region
          %s184 = smul.u32 64, %s14
          %p185 = scmp.lt.s32.totalorder %s184, 127
          %s186 = scalar_select %p185, %s184, 127
          %s187 = smul.addr %s186, 4
          %s188 = scalar_lea.vmem %s0, %s187
          %s189 = smul.u32 64, %s14
        $region36: #{tpu_custom_call.1} parent=31 // pred_fallthru
          _
      $region32: #{tpu_custom_call.1} parent=5 // pred_fallthru
        _
      %p190 = scmp.le.s32.totalorder 1, %s14
      %p191 = scmp.lt.s32.totalorder %s14, 3
      %p192 = pnand %p190, %p191
      %p193 = pneg %p192
      // Predicated region
      $region37: #{tpu_custom_call.1} parent=5 // pred_check
        _
      $region38: #{tpu_custom_call.1} parent=5 // pred_check_branch
        %195 = sbr.rel (%p192) target = $region40
      $region39: #{tpu_custom_call.1} parent=5 // pred_region
        %s196 = ssub.s32 %s14, 1
        %s197 = smul.u32 64, %s19
        %p198 = scmp.lt.s32.totalorder %s197, 127
        %s199 = scalar_select %p198, %s197, 127
        %s200 = smul.addr %s199, 4
        %s201 = scalar_lea.vmem %s0, %s200
        %p202 = pneg %p40
        %p203 = pneg %p37
        %p204 = pneg %p61
        %p205 = pneg %p58
        %p206 = pneg %p82
        %p207 = pneg %p79
        %p208 = pneg %p103
        %p209 = pneg %p100
        %p210 = pneg %p124
        %p211 = pneg %p121
        %p212 = pneg %p150
        %p213 = pneg %p147
        %s214 = sand.u32 %s137, 1
        %s215 = scalar_lea.sflag [#allocation3], %s214
        %s216 = sand.u32 %s137, 1
        %s217 = smul.addr %s216, 512
        %s218 = scalar_lea.vmem [#allocation2], %s217
        %s219 = smul.u32 64, %s19
        %p220 = scmp.lt.s32.totalorder %s219, 127
        %s221 = scalar_select %p220, %s219, 127
        %s222 = smul.addr %s221, 4
        %s223 = scalar_lea.vmem %s0, %s222
        %s224 = smul.u32 64, %s19
        %s225 = smul.u32 64, %s19
        %v227 = vld [vmem:[%s223] sm:$0xf]
        %v228 = vld [vmem:[%s223 + $0x4] sm:$0xf]
        %v229 = vld [vmem:[%s223 + $0x8] sm:$0xf]
        %v230 = vld [vmem:[%s223 + $0xc] sm:$0xf]
        %v231 = vld [vmem:[%s223 + $0x10] sm:$0xf]
        %v232 = vld [vmem:[%s223 + $0x14] sm:$0xf]
        %v233 = vld [vmem:[%s223 + $0x18] sm:$0xf]
        %v234 = vld [vmem:[%s223 + $0x1c] sm:$0xf]
        %v235 = vld [vmem:[%s223 + $0x20] sm:$0xf]
        %v236 = vld [vmem:[%s223 + $0x24] sm:$0xf]
        %v237 = vld [vmem:[%s223 + $0x28] sm:$0xf]
        %v238 = vld [vmem:[%s223 + $0x2c] sm:$0xf]
        %v239 = vld [vmem:[%s223 + $0x30] sm:$0xf]
        %v240 = vld [vmem:[%s223 + $0x34] sm:$0xf]
        %v241 = vld [vmem:[%s223 + $0x38] sm:$0xf]
        %v242 = vld [vmem:[%s223 + $0x3c] sm:$0xf]
        %v243 = vld [vmem:[%s223 + $0x40] sm:$0xf]
        %v244 = vld [vmem:[%s223 + $0x44] sm:$0xf]
        %v245 = vld [vmem:[%s223 + $0x48] sm:$0xf]
        %v246 = vld [vmem:[%s223 + $0x4c] sm:$0xf]
        %v247 = vld [vmem:[%s223 + $0x50] sm:$0xf]
        %v248 = vld [vmem:[%s223 + $0x54] sm:$0xf]
        %v249 = vld [vmem:[%s223 + $0x58] sm:$0xf]
        %v250 = vld [vmem:[%s223 + $0x5c] sm:$0xf]
        %v251 = vld [vmem:[%s223 + $0x60] sm:$0xf]
        %v252 = vld [vmem:[%s223 + $0x64] sm:$0xf]
        %v253 = vld [vmem:[%s223 + $0x68] sm:$0xf]
        %v254 = vld [vmem:[%s223 + $0x6c] sm:$0xf]
        %v255 = vld [vmem:[%s223 + $0x70] sm:$0xf]
        %v256 = vld [vmem:[%s223 + $0x74] sm:$0xf]
        %v257 = vld [vmem:[%s223 + $0x78] sm:$0xf]
        %v258 = vld [vmem:[%s223 + $0x7c] sm:$0xf]
        %v259 = vld [vmem:[%s223 + $0x80] sm:$0xf]
        %v260 = vld [vmem:[%s223 + $0x84] sm:$0xf]
        %v261 = vld [vmem:[%s223 + $0x88] sm:$0xf]
        %v262 = vld [vmem:[%s223 + $0x8c] sm:$0xf]
        %v263 = vld [vmem:[%s223 + $0x90] sm:$0xf]
        %v264 = vld [vmem:[%s223 + $0x94] sm:$0xf]
        %v265 = vld [vmem:[%s223 + $0x98] sm:$0xf]
        %v266 = vld [vmem:[%s223 + $0x9c] sm:$0xf]
        %v267 = vld [vmem:[%s223 + $0xa0] sm:$0xf]
        %v268 = vld [vmem:[%s223 + $0xa4] sm:$0xf]
        %v269 = vld [vmem:[%s223 + $0xa8] sm:$0xf]
        %v270 = vld [vmem:[%s223 + $0xac] sm:$0xf]
        %v271 = vld [vmem:[%s223 + $0xb0] sm:$0xf]
        %v272 = vld [vmem:[%s223 + $0xb4] sm:$0xf]
        %v273 = vld [vmem:[%s223 + $0xb8] sm:$0xf]
        %v274 = vld [vmem:[%s223 + $0xbc] sm:$0xf]
        %v275 = vld [vmem:[%s223 + $0xc0] sm:$0xf]
        %v276 = vld [vmem:[%s223 + $0xc4] sm:$0xf]
        %v277 = vld [vmem:[%s223 + $0xc8] sm:$0xf]
        %v278 = vld [vmem:[%s223 + $0xcc] sm:$0xf]
        %v279 = vld [vmem:[%s223 + $0xd0] sm:$0xf]
        %v280 = vld [vmem:[%s223 + $0xd4] sm:$0xf]
        %v281 = vld [vmem:[%s223 + $0xd8] sm:$0xf]
        %v282 = vld [vmem:[%s223 + $0xdc] sm:$0xf]
        %v283 = vld [vmem:[%s223 + $0xe0] sm:$0xf]
        %v284 = vld [vmem:[%s223 + $0xe4] sm:$0xf]
        %v285 = vld [vmem:[%s223 + $0xe8] sm:$0xf]
        %v286 = vld [vmem:[%s223 + $0xec] sm:$0xf]
        %v287 = vld [vmem:[%s223 + $0xf0] sm:$0xf]
        %v288 = vld [vmem:[%s223 + $0xf4] sm:$0xf]
        %v289 = vld [vmem:[%s223 + $0xf8] sm:$0xf]
        %v290 = vld [vmem:[%s223 + $0xfc] sm:$0xf]
        %v291 = vld [vmem:[%s1] sm:$0xf]
        %v292 = vld [vmem:[%s2] sm:$0x1]
        %v294 = vperm.slane %v292, 0
        %v360 = vunpack.c.l.b16 %v227
        %v361 = vunpack.c.l.b16 %v228
        %v362 = vunpack.c.l.b16 %v229
        %v363 = vunpack.c.l.b16 %v230
        %v364 = vunpack.c.l.b16 %v231
        %v365 = vunpack.c.l.b16 %v232
        %v366 = vunpack.c.l.b16 %v233
        %v367 = vunpack.c.l.b16 %v234
        %v368 = vunpack.c.l.b16 %v235
        %v369 = vunpack.c.l.b16 %v236
        %v370 = vunpack.c.l.b16 %v237
        %v371 = vunpack.c.l.b16 %v238
        %v372 = vunpack.c.l.b16 %v239
        %v373 = vunpack.c.l.b16 %v240
        %v374 = vunpack.c.l.b16 %v241
        %v375 = vunpack.c.l.b16 %v242
        %v376 = vunpack.c.l.b16 %v243
        %v377 = vunpack.c.l.b16 %v244
        %v378 = vunpack.c.l.b16 %v245
        %v379 = vunpack.c.l.b16 %v246
        %v380 = vunpack.c.l.b16 %v247
        %v381 = vunpack.c.l.b16 %v248
        %v382 = vunpack.c.l.b16 %v249
        %v383 = vunpack.c.l.b16 %v250
        %v384 = vunpack.c.l.b16 %v251
        %v385 = vunpack.c.l.b16 %v252
        %v386 = vunpack.c.l.b16 %v253
        %v387 = vunpack.c.l.b16 %v254
        %v388 = vunpack.c.l.b16 %v255
        %v389 = vunpack.c.l.b16 %v256
        %v390 = vunpack.c.l.b16 %v257
        %v391 = vunpack.c.l.b16 %v258
        %v392 = vunpack.c.l.b16 %v259
        %v393 = vunpack.c.l.b16 %v260
        %v394 = vunpack.c.l.b16 %v261
        %v395 = vunpack.c.l.b16 %v262
        %v396 = vunpack.c.l.b16 %v263
        %v397 = vunpack.c.l.b16 %v264
        %v398 = vunpack.c.l.b16 %v265
        %v399 = vunpack.c.l.b16 %v266
        %v400 = vunpack.c.l.b16 %v267
        %v401 = vunpack.c.l.b16 %v268
        %v402 = vunpack.c.l.b16 %v269
        %v403 = vunpack.c.l.b16 %v270
        %v404 = vunpack.c.l.b16 %v271
        %v405 = vunpack.c.l.b16 %v272
        %v406 = vunpack.c.l.b16 %v273
        %v407 = vunpack.c.l.b16 %v274
        %v408 = vunpack.c.l.b16 %v275
        %v409 = vunpack.c.l.b16 %v276
        %v410 = vunpack.c.l.b16 %v277
        %v411 = vunpack.c.l.b16 %v278
        %v412 = vunpack.c.l.b16 %v279
        %v413 = vunpack.c.l.b16 %v280
        %v414 = vunpack.c.l.b16 %v281
        %v415 = vunpack.c.l.b16 %v282
        %v416 = vunpack.c.l.b16 %v283
        %v417 = vunpack.c.l.b16 %v284
        %v418 = vunpack.c.l.b16 %v285
        %v419 = vunpack.c.l.b16 %v286
        %v420 = vunpack.c.l.b16 %v287
        %v421 = vunpack.c.l.b16 %v288
        %v422 = vunpack.c.l.b16 %v289
        %v423 = vunpack.c.l.b16 %v290
        %v424 = vpack.c.b16 %v361, %v360
        %v425 = vpack.c.b16 %v363, %v362
        %v426 = vpack.c.b16 %v365, %v364
        %v427 = vpack.c.b16 %v367, %v366
        %v428 = vpack.c.b16 %v369, %v368
        %v429 = vpack.c.b16 %v371, %v370
        %v430 = vpack.c.b16 %v373, %v372
        %v431 = vpack.c.b16 %v375, %v374
        %v432 = vpack.c.b16 %v377, %v376
        %v433 = vpack.c.b16 %v379, %v378
        %v434 = vpack.c.b16 %v381, %v380
        %v435 = vpack.c.b16 %v383, %v382
        %v436 = vpack.c.b16 %v385, %v384
        %v437 = vpack.c.b16 %v387, %v386
        %v438 = vpack.c.b16 %v389, %v388
        %v439 = vpack.c.b16 %v391, %v390
        %v440 = vpack.c.b16 %v393, %v392
        %v441 = vpack.c.b16 %v395, %v394
        %v442 = vpack.c.b16 %v397, %v396
        %v443 = vpack.c.b16 %v399, %v398
        %v444 = vpack.c.b16 %v401, %v400
        %v445 = vpack.c.b16 %v403, %v402
        %v446 = vpack.c.b16 %v405, %v404
        %v447 = vpack.c.b16 %v407, %v406
        %v448 = vpack.c.b16 %v409, %v408
        %v449 = vpack.c.b16 %v411, %v410
        %v450 = vpack.c.b16 %v413, %v412
        %v451 = vpack.c.b16 %v415, %v414
        %v452 = vpack.c.b16 %v417, %v416
        %v453 = vpack.c.b16 %v419, %v418
        %v454 = vpack.c.b16 %v421, %v420
        %v455 = vpack.c.b16 %v423, %v422
        %vm456 = vcmask 64512
        %v458 = vsel %vm456, %v424, 0
        %v461 = vsel %vm456, %v425, 0
        %v464 = vsel %vm456, %v426, 0
        %v467 = vsel %vm456, %v427, 0
        %v470 = vsel %vm456, %v428, 0
        %v473 = vsel %vm456, %v429, 0
        %v476 = vsel %vm456, %v430, 0
        %v479 = vsel %vm456, %v431, 0
        %v482 = vsel %vm456, %v432, 0
        %v485 = vsel %vm456, %v433, 0
        %v488 = vsel %vm456, %v434, 0
        %v491 = vsel %vm456, %v435, 0
        %v494 = vsel %vm456, %v436, 0
        %v497 = vsel %vm456, %v437, 0
        %v500 = vsel %vm456, %v438, 0
        %v503 = vsel %vm456, %v439, 0
        %v506 = vsel %vm456, %v440, 0
        %v509 = vsel %vm456, %v441, 0
        %v512 = vsel %vm456, %v442, 0
        %v515 = vsel %vm456, %v443, 0
        %v518 = vsel %vm456, %v444, 0
        %v521 = vsel %vm456, %v445, 0
        %v524 = vsel %vm456, %v446, 0
        %v527 = vsel %vm456, %v447, 0
        %v530 = vsel %vm456, %v448, 0
        %v533 = vsel %vm456, %v449, 0
        %v536 = vsel %vm456, %v450, 0
        %v539 = vsel %vm456, %v451, 0
        %v542 = vsel %vm456, %v452, 0
        %v545 = vsel %vm456, %v453, 0
        %v548 = vsel %vm456, %v454, 0
        %v551 = vsel %vm456, %v455, 0
        %vm553 = vcmask 1043456
        %v555 = vsel %vm553, %v291, 0
        %557 = vmatpush.bf16.msra.mxu0 0
        %558 = vmatpush.bf16.msra.mxu0 0
        %559 = vmatpush.bf16.msra.mxu0 0
        %560 = vmatpush.bf16.msra.mxu0 0
        %561 = vmatpush.bf16.msra.mxu0 0
        %562 = vmatpush.bf16.msra.mxu0 0
        %563 = vmatpush.bf16.msra.mxu0 0
        %564 = vmatpush.bf16.msra.mxu0 %v555
        %565 = vmatmul.bf16.gmra.mxu0 %v458
        %v566 = vpop.f32.mrf.mxu0
        %v567 = vadd.f32 %v294, %v566
        %v568 = vpop.f32.mrf.mxu0
        %v569 = vadd.f32 %v294, %v568
        %570 = vmatmul.bf16.gmra.mxu0 %v461
        %v571 = vpop.f32.mrf.mxu0
        %v572 = vadd.f32 %v294, %v571
        %v573 = vpop.f32.mrf.mxu0
        %v574 = vadd.f32 %v294, %v573
        %575 = vmatmul.bf16.gmra.mxu0 %v464
        %v576 = vpop.f32.mrf.mxu0
        %v577 = vadd.f32 %v294, %v576
        %v578 = vpop.f32.mrf.mxu0
        %v579 = vadd.f32 %v294, %v578
        %580 = vmatmul.bf16.gmra.mxu0 %v467
        %v581 = vpop.f32.mrf.mxu0
        %v582 = vadd.f32 %v294, %v581
        %v583 = vpop.f32.mrf.mxu0
        %v584 = vadd.f32 %v294, %v583
        %585 = vmatmul.bf16.gmra.mxu0 %v470
        %v586 = vpop.f32.mrf.mxu0
        %v587 = vadd.f32 %v294, %v586
        %v588 = vpop.f32.mrf.mxu0
        %v589 = vadd.f32 %v294, %v588
        %590 = vmatmul.bf16.gmra.mxu0 %v473
        %v591 = vpop.f32.mrf.mxu0
        %v592 = vadd.f32 %v294, %v591
        %v593 = vpop.f32.mrf.mxu0
        %v594 = vadd.f32 %v294, %v593
        %595 = vmatmul.bf16.gmra.mxu0 %v476
        %v596 = vpop.f32.mrf.mxu0
        %v597 = vadd.f32 %v294, %v596
        %v598 = vpop.f32.mrf.mxu0
        %v599 = vadd.f32 %v294, %v598
        %600 = vmatmul.bf16.gmra.mxu0 %v479
        %v601 = vpop.f32.mrf.mxu0
        %v602 = vadd.f32 %v294, %v601
        %v603 = vpop.f32.mrf.mxu0
        %v604 = vadd.f32 %v294, %v603
        %605 = vmatmul.bf16.gmra.mxu0 %v482
        %v606 = vpop.f32.mrf.mxu0
        %v607 = vadd.f32 %v294, %v606
        %v608 = vpop.f32.mrf.mxu0
        %v609 = vadd.f32 %v294, %v608
        %610 = vmatmul.bf16.gmra.mxu0 %v485
        %v611 = vpop.f32.mrf.mxu0
        %v612 = vadd.f32 %v294, %v611
        %v613 = vpop.f32.mrf.mxu0
        %v614 = vadd.f32 %v294, %v613
        %615 = vmatmul.bf16.gmra.mxu0 %v488
        %v616 = vpop.f32.mrf.mxu0
        %v617 = vadd.f32 %v294, %v616
        %v618 = vpop.f32.mrf.mxu0
        %v619 = vadd.f32 %v294, %v618
        %620 = vmatmul.bf16.gmra.mxu0 %v491
        %v621 = vpop.f32.mrf.mxu0
        %v622 = vadd.f32 %v294, %v621
        %v623 = vpop.f32.mrf.mxu0
        %v624 = vadd.f32 %v294, %v623
        %625 = vmatmul.bf16.gmra.mxu0 %v494
        %v626 = vpop.f32.mrf.mxu0
        %v627 = vadd.f32 %v294, %v626
        %v628 = vpop.f32.mrf.mxu0
        %v629 = vadd.f32 %v294, %v628
        %630 = vmatmul.bf16.gmra.mxu0 %v497
        %v631 = vpop.f32.mrf.mxu0
        %v632 = vadd.f32 %v294, %v631
        %v633 = vpop.f32.mrf.mxu0
        %v634 = vadd.f32 %v294, %v633
        %635 = vmatmul.bf16.gmra.mxu0 %v500
        %v636 = vpop.f32.mrf.mxu0
        %v637 = vadd.f32 %v294, %v636
        %v638 = vpop.f32.mrf.mxu0
        %v639 = vadd.f32 %v294, %v638
        %640 = vmatmul.bf16.gmra.mxu0 %v503
        %v641 = vpop.f32.mrf.mxu0
        %v642 = vadd.f32 %v294, %v641
        %v643 = vpop.f32.mrf.mxu0
        %v644 = vadd.f32 %v294, %v643
        %645 = vmatmul.bf16.gmra.mxu0 %v506
        %v646 = vpop.f32.mrf.mxu0
        %v647 = vadd.f32 %v294, %v646
        %v648 = vpop.f32.mrf.mxu0
        %v649 = vadd.f32 %v294, %v648
        %650 = vmatmul.bf16.gmra.mxu0 %v509
        %v651 = vpop.f32.mrf.mxu0
        %v652 = vadd.f32 %v294, %v651
        %v653 = vpop.f32.mrf.mxu0
        %v654 = vadd.f32 %v294, %v653
        %655 = vmatmul.bf16.gmra.mxu0 %v512
        %v656 = vpop.f32.mrf.mxu0
        %v657 = vadd.f32 %v294, %v656
        %v658 = vpop.f32.mrf.mxu0
        %v659 = vadd.f32 %v294, %v658
        %660 = vmatmul.bf16.gmra.mxu0 %v515
        %v661 = vpop.f32.mrf.mxu0
        %v662 = vadd.f32 %v294, %v661
        %v663 = vpop.f32.mrf.mxu0
        %v664 = vadd.f32 %v294, %v663
        %665 = vmatmul.bf16.gmra.mxu0 %v518
        %v666 = vpop.f32.mrf.mxu0
        %v667 = vadd.f32 %v294, %v666
        %v668 = vpop.f32.mrf.mxu0
        %v669 = vadd.f32 %v294, %v668
        %670 = vmatmul.bf16.gmra.mxu0 %v521
        %v671 = vpop.f32.mrf.mxu0
        %v672 = vadd.f32 %v294, %v671
        %v673 = vpop.f32.mrf.mxu0
        %v674 = vadd.f32 %v294, %v673
        %675 = vmatmul.bf16.gmra.mxu0 %v524
        %v676 = vpop.f32.mrf.mxu0
        %v677 = vadd.f32 %v294, %v676
        %v678 = vpop.f32.mrf.mxu0
        %v679 = vadd.f32 %v294, %v678
        %680 = vmatmul.bf16.gmra.mxu0 %v527
        %v681 = vpop.f32.mrf.mxu0
        %v682 = vadd.f32 %v294, %v681
        %v683 = vpop.f32.mrf.mxu0
        %v684 = vadd.f32 %v294, %v683
        %685 = vmatmul.bf16.gmra.mxu0 %v530
        %v686 = vpop.f32.mrf.mxu0
        %v687 = vadd.f32 %v294, %v686
        %v688 = vpop.f32.mrf.mxu0
        %v689 = vadd.f32 %v294, %v688
        %690 = vmatmul.bf16.gmra.mxu0 %v533
        %v691 = vpop.f32.mrf.mxu0
        %v692 = vadd.f32 %v294, %v691
        %v693 = vpop.f32.mrf.mxu0
        %v694 = vadd.f32 %v294, %v693
        %695 = vmatmul.bf16.gmra.mxu0 %v536
        %v696 = vpop.f32.mrf.mxu0
        %v697 = vadd.f32 %v294, %v696
        %v698 = vpop.f32.mrf.mxu0
        %v699 = vadd.f32 %v294, %v698
        %700 = vmatmul.bf16.gmra.mxu0 %v539
        %v701 = vpop.f32.mrf.mxu0
        %v702 = vadd.f32 %v294, %v701
        %v703 = vpop.f32.mrf.mxu0
        %v704 = vadd.f32 %v294, %v703
        %705 = vmatmul.bf16.gmra.mxu0 %v542
        %v706 = vpop.f32.mrf.mxu0
        %v707 = vadd.f32 %v294, %v706
        %v708 = vpop.f32.mrf.mxu0
        %v709 = vadd.f32 %v294, %v708
        %710 = vmatmul.bf16.gmra.mxu0 %v545
        %v711 = vpop.f32.mrf.mxu0
        %v712 = vadd.f32 %v294, %v711
        %v713 = vpop.f32.mrf.mxu0
        %v714 = vadd.f32 %v294, %v713
        %715 = vmatmul.bf16.gmra.mxu0 %v548
        %v716 = vpop.f32.mrf.mxu0
        %v717 = vadd.f32 %v294, %v716
        %v718 = vpop.f32.mrf.mxu0
        %v719 = vadd.f32 %v294, %v718
        %720 = vmatmul.bf16.gmra.mxu0 %v551
        %v721 = vpop.f32.mrf.mxu0
        %v722 = vadd.f32 %v294, %v721
        %v723 = vpop.f32.mrf.mxu0
        %v724 = vadd.f32 %v294, %v723
        %725 = vdwg.mxu0
        %v726 = vmax.f32 %v567, 0.0
        %v727 = vmax.f32 %v569, 0.0
        %v728 = vmax.f32 %v572, 0.0
        %v729 = vmax.f32 %v574, 0.0
        %v730 = vmax.f32 %v577, 0.0
        %v731 = vmax.f32 %v579, 0.0
        %v732 = vmax.f32 %v582, 0.0
        %v733 = vmax.f32 %v584, 0.0
        %v734 = vmax.f32 %v587, 0.0
        %v735 = vmax.f32 %v589, 0.0
        %v736 = vmax.f32 %v592, 0.0
        %v737 = vmax.f32 %v594, 0.0
        %v738 = vmax.f32 %v597, 0.0
        %v739 = vmax.f32 %v599, 0.0
        %v740 = vmax.f32 %v602, 0.0
        %v741 = vmax.f32 %v604, 0.0
        %v742 = vmax.f32 %v607, 0.0
        %v743 = vmax.f32 %v609, 0.0
        %v744 = vmax.f32 %v612, 0.0
        %v745 = vmax.f32 %v614, 0.0
        %v746 = vmax.f32 %v617, 0.0
        %v747 = vmax.f32 %v619, 0.0
        %v748 = vmax.f32 %v622, 0.0
        %v749 = vmax.f32 %v624, 0.0
        %v750 = vmax.f32 %v627, 0.0
        %v751 = vmax.f32 %v629, 0.0
        %v752 = vmax.f32 %v632, 0.0
        %v753 = vmax.f32 %v634, 0.0
        %v754 = vmax.f32 %v637, 0.0
        %v755 = vmax.f32 %v639, 0.0
        %v756 = vmax.f32 %v642, 0.0
        %v757 = vmax.f32 %v644, 0.0
        %v758 = vmax.f32 %v647, 0.0
        %v759 = vmax.f32 %v649, 0.0
        %v760 = vmax.f32 %v652, 0.0
        %v761 = vmax.f32 %v654, 0.0
        %v762 = vmax.f32 %v657, 0.0
        %v763 = vmax.f32 %v659, 0.0
        %v764 = vmax.f32 %v662, 0.0
        %v765 = vmax.f32 %v664, 0.0
        %v766 = vmax.f32 %v667, 0.0
        %v767 = vmax.f32 %v669, 0.0
        %v768 = vmax.f32 %v672, 0.0
        %v769 = vmax.f32 %v674, 0.0
        %v770 = vmax.f32 %v677, 0.0
        %v771 = vmax.f32 %v679, 0.0
        %v772 = vmax.f32 %v682, 0.0
        %v773 = vmax.f32 %v684, 0.0
        %v774 = vmax.f32 %v687, 0.0
        %v775 = vmax.f32 %v689, 0.0
        %v776 = vmax.f32 %v692, 0.0
        %v777 = vmax.f32 %v694, 0.0
        %v778 = vmax.f32 %v697, 0.0
        %v779 = vmax.f32 %v699, 0.0
        %v780 = vmax.f32 %v702, 0.0
        %v781 = vmax.f32 %v704, 0.0
        %v782 = vmax.f32 %v707, 0.0
        %v783 = vmax.f32 %v709, 0.0
        %v784 = vmax.f32 %v712, 0.0
        %v785 = vmax.f32 %v714, 0.0
        %v786 = vmax.f32 %v717, 0.0
        %v787 = vmax.f32 %v719, 0.0
        %v788 = vmax.f32 %v722, 0.0
        %v789 = vmax.f32 %v724, 0.0
        %v790 = vpack.c.bf16 %v727, %v726
        %v791 = vpack.c.bf16 %v729, %v728
        %v792 = vpack.c.bf16 %v731, %v730
        %v793 = vpack.c.bf16 %v733, %v732
        %v794 = vpack.c.bf16 %v735, %v734
        %v795 = vpack.c.bf16 %v737, %v736
        %v796 = vpack.c.bf16 %v739, %v738
        %v797 = vpack.c.bf16 %v741, %v740
        %v798 = vpack.c.bf16 %v743, %v742
        %v799 = vpack.c.bf16 %v745, %v744
        %v800 = vpack.c.bf16 %v747, %v746
        %v801 = vpack.c.bf16 %v749, %v748
        %v802 = vpack.c.bf16 %v751, %v750
        %v803 = vpack.c.bf16 %v753, %v752
        %v804 = vpack.c.bf16 %v755, %v754
        %v805 = vpack.c.bf16 %v757, %v756
        %v806 = vpack.c.bf16 %v759, %v758
        %v807 = vpack.c.bf16 %v761, %v760
        %v808 = vpack.c.bf16 %v763, %v762
        %v809 = vpack.c.bf16 %v765, %v764
        %v810 = vpack.c.bf16 %v767, %v766
        %v811 = vpack.c.bf16 %v769, %v768
        %v812 = vpack.c.bf16 %v771, %v770
        %v813 = vpack.c.bf16 %v773, %v772
        %v814 = vpack.c.bf16 %v775, %v774
        %v815 = vpack.c.bf16 %v777, %v776
        %v816 = vpack.c.bf16 %v779, %v778
        %v817 = vpack.c.bf16 %v781, %v780
        %v818 = vpack.c.bf16 %v783, %v782
        %v819 = vpack.c.bf16 %v785, %v784
        %v820 = vpack.c.bf16 %v787, %v786
        %v821 = vpack.c.bf16 %v789, %v788
        %v822 = vld [vmem:[%s3] sm:$0xf]
        %v823 = vld [vmem:[%s3 + $0x4] sm:$0xf]
        %v824 = vld [vmem:[%s3 + $0x8] sm:$0xf]
        %v825 = vld [vmem:[%s3 + $0xc] sm:$0xf]
        %v826 = vld [vmem:[%s3 + $0x10] sm:$0xf]
        %v827 = vld [vmem:[%s3 + $0x14] sm:$0xf]
        %v828 = vld [vmem:[%s3 + $0x18] sm:$0xf]
        %v829 = vld [vmem:[%s3 + $0x1c] sm:$0xf]
        %v830 = vld [vmem:[%s3 + $0x20] sm:$0xf]
        %v831 = vld [vmem:[%s3 + $0x24] sm:$0xf]
        %v832 = vld [vmem:[%s3 + $0x28] sm:$0xf]
        %v833 = vld [vmem:[%s3 + $0x2c] sm:$0xf]
        %v834 = vld [vmem:[%s3 + $0x30] sm:$0xf]
        %v835 = vld [vmem:[%s3 + $0x34] sm:$0xf]
        %v836 = vld [vmem:[%s3 + $0x38] sm:$0xf]
        %v837 = vld [vmem:[%s3 + $0x3c] sm:$0xf]
        %v838 = vld [vmem:[%s4] sm:$0x1]
        %v840 = vperm.slane %v838, 0
        %v858 = vunpack.c.l.b16 %v822
        %v859 = vunpack.c.l.b16 %v823
        %v860 = vunpack.c.l.b16 %v824
        %v861 = vunpack.c.l.b16 %v825
        %v862 = vunpack.c.l.b16 %v826
        %v863 = vunpack.c.l.b16 %v827
        %v864 = vunpack.c.l.b16 %v828
        %v865 = vunpack.c.l.b16 %v829
        %v866 = vunpack.c.l.b16 %v830
        %v867 = vunpack.c.l.b16 %v831
        %v868 = vunpack.c.l.b16 %v832
        %v869 = vunpack.c.l.b16 %v833
        %v870 = vunpack.c.l.b16 %v834
        %v871 = vunpack.c.l.b16 %v835
        %v872 = vunpack.c.l.b16 %v836
        %v873 = vunpack.c.l.b16 %v837
        %v874 = vpack.c.b16 %v859, %v858
        %v875 = vpack.c.b16 %v861, %v860
        %v876 = vpack.c.b16 %v863, %v862
        %v877 = vpack.c.b16 %v865, %v864
        %v878 = vpack.c.b16 %v867, %v866
        %v879 = vpack.c.b16 %v869, %v868
        %v880 = vpack.c.b16 %v871, %v870
        %v881 = vpack.c.b16 %v873, %v872
        %890 = vmatpush.bf16.msra.mxu0 %v881
        %891 = vmatpush.bf16.msra.mxu0 %v880
        %892 = vmatpush.bf16.msra.mxu0 %v879
        %893 = vmatpush.bf16.msra.mxu0 %v878
        %894 = vmatpush.bf16.msra.mxu0 %v877
        %895 = vmatpush.bf16.msra.mxu0 %v876
        %896 = vmatpush.bf16.msra.mxu0 %v875
        %897 = vmatpush.bf16.msra.mxu0 %v874
        %898 = vmatmul.bf16.gmra.mxu0 %v790
        %v899 = vpop.f32.mrf.mxu0
        %v900 = vadd.f32 %v840, %v899
        %v901 = vpop.f32.mrf.mxu0
        %v902 = vadd.f32 %v840, %v901
        %903 = vmatmul.bf16.gmra.mxu0 %v791
        %v904 = vpop.f32.mrf.mxu0
        %v905 = vadd.f32 %v840, %v904
        %v906 = vpop.f32.mrf.mxu0
        %v907 = vadd.f32 %v840, %v906
        %908 = vmatmul.bf16.gmra.mxu0 %v792
        %v909 = vpop.f32.mrf.mxu0
        %v910 = vadd.f32 %v840, %v909
        %v911 = vpop.f32.mrf.mxu0
        %v912 = vadd.f32 %v840, %v911
        %913 = vmatmul.bf16.gmra.mxu0 %v793
        %v914 = vpop.f32.mrf.mxu0
        %v915 = vadd.f32 %v840, %v914
        %v916 = vpop.f32.mrf.mxu0
        %v917 = vadd.f32 %v840, %v916
        %918 = vmatmul.bf16.gmra.mxu0 %v794
        %v919 = vpop.f32.mrf.mxu0
        %v920 = vadd.f32 %v840, %v919
        %v921 = vpop.f32.mrf.mxu0
        %v922 = vadd.f32 %v840, %v921
        %923 = vmatmul.bf16.gmra.mxu0 %v795
        %v924 = vpop.f32.mrf.mxu0
        %v925 = vadd.f32 %v840, %v924
        %v926 = vpop.f32.mrf.mxu0
        %v927 = vadd.f32 %v840, %v926
        %928 = vmatmul.bf16.gmra.mxu0 %v796
        %v929 = vpop.f32.mrf.mxu0
        %v930 = vadd.f32 %v840, %v929
        %v931 = vpop.f32.mrf.mxu0
        %v932 = vadd.f32 %v840, %v931
        %933 = vmatmul.bf16.gmra.mxu0 %v797
        %v934 = vpop.f32.mrf.mxu0
        %v935 = vadd.f32 %v840, %v934
        %v936 = vpop.f32.mrf.mxu0
        %v937 = vadd.f32 %v840, %v936
        %938 = vmatmul.bf16.gmra.mxu0 %v798
        %v939 = vpop.f32.mrf.mxu0
        %v940 = vadd.f32 %v840, %v939
        %v941 = vpop.f32.mrf.mxu0
        %v942 = vadd.f32 %v840, %v941
        %943 = vmatmul.bf16.gmra.mxu0 %v799
        %v944 = vpop.f32.mrf.mxu0
        %v945 = vadd.f32 %v840, %v944
        %v946 = vpop.f32.mrf.mxu0
        %v947 = vadd.f32 %v840, %v946
        %948 = vmatmul.bf16.gmra.mxu0 %v800
        %v949 = vpop.f32.mrf.mxu0
        %v950 = vadd.f32 %v840, %v949
        %v951 = vpop.f32.mrf.mxu0
        %v952 = vadd.f32 %v840, %v951
        %953 = vmatmul.bf16.gmra.mxu0 %v801
        %v954 = vpop.f32.mrf.mxu0
        %v955 = vadd.f32 %v840, %v954
        %v956 = vpop.f32.mrf.mxu0
        %v957 = vadd.f32 %v840, %v956
        %958 = vmatmul.bf16.gmra.mxu0 %v802
        %v959 = vpop.f32.mrf.mxu0
        %v960 = vadd.f32 %v840, %v959
        %v961 = vpop.f32.mrf.mxu0
        %v962 = vadd.f32 %v840, %v961
        %963 = vmatmul.bf16.gmra.mxu0 %v803
        %v964 = vpop.f32.mrf.mxu0
        %v965 = vadd.f32 %v840, %v964
        %v966 = vpop.f32.mrf.mxu0
        %v967 = vadd.f32 %v840, %v966
        %968 = vmatmul.bf16.gmra.mxu0 %v804
        %v969 = vpop.f32.mrf.mxu0
        %v970 = vadd.f32 %v840, %v969
        %v971 = vpop.f32.mrf.mxu0
        %v972 = vadd.f32 %v840, %v971
        %973 = vmatmul.bf16.gmra.mxu0 %v805
        %v974 = vpop.f32.mrf.mxu0
        %v975 = vadd.f32 %v840, %v974
        %v976 = vpop.f32.mrf.mxu0
        %v977 = vadd.f32 %v840, %v976
        %978 = vmatmul.bf16.gmra.mxu0 %v806
        %v979 = vpop.f32.mrf.mxu0
        %v980 = vadd.f32 %v840, %v979
        %v981 = vpop.f32.mrf.mxu0
        %v982 = vadd.f32 %v840, %v981
        %983 = vmatmul.bf16.gmra.mxu0 %v807
        %v984 = vpop.f32.mrf.mxu0
        %v985 = vadd.f32 %v840, %v984
        %v986 = vpop.f32.mrf.mxu0
        %v987 = vadd.f32 %v840, %v986
        %988 = vmatmul.bf16.gmra.mxu0 %v808
        %v989 = vpop.f32.mrf.mxu0
        %v990 = vadd.f32 %v840, %v989
        %v991 = vpop.f32.mrf.mxu0
        %v992 = vadd.f32 %v840, %v991
        %993 = vmatmul.bf16.gmra.mxu0 %v809
        %v994 = vpop.f32.mrf.mxu0
        %v995 = vadd.f32 %v840, %v994
        %v996 = vpop.f32.mrf.mxu0
        %v997 = vadd.f32 %v840, %v996
        %998 = vmatmul.bf16.gmra.mxu0 %v810
        %v999 = vpop.f32.mrf.mxu0
        %v1000 = vadd.f32 %v840, %v999
        %v1001 = vpop.f32.mrf.mxu0
        %v1002 = vadd.f32 %v840, %v1001
        %1003 = vmatmul.bf16.gmra.mxu0 %v811
        %v1004 = vpop.f32.mrf.mxu0
        %v1005 = vadd.f32 %v840, %v1004
        %v1006 = vpop.f32.mrf.mxu0
        %v1007 = vadd.f32 %v840, %v1006
        %1008 = vmatmul.bf16.gmra.mxu0 %v812
        %v1009 = vpop.f32.mrf.mxu0
        %v1010 = vadd.f32 %v840, %v1009
        %v1011 = vpop.f32.mrf.mxu0
        %v1012 = vadd.f32 %v840, %v1011
        %1013 = vmatmul.bf16.gmra.mxu0 %v813
        %v1014 = vpop.f32.mrf.mxu0
        %v1015 = vadd.f32 %v840, %v1014
        %v1016 = vpop.f32.mrf.mxu0
        %v1017 = vadd.f32 %v840, %v1016
        %1018 = vmatmul.bf16.gmra.mxu0 %v814
        %v1019 = vpop.f32.mrf.mxu0
        %v1020 = vadd.f32 %v840, %v1019
        %v1021 = vpop.f32.mrf.mxu0
        %v1022 = vadd.f32 %v840, %v1021
        %1023 = vmatmul.bf16.gmra.mxu0 %v815
        %v1024 = vpop.f32.mrf.mxu0
        %v1025 = vadd.f32 %v840, %v1024
        %v1026 = vpop.f32.mrf.mxu0
        %v1027 = vadd.f32 %v840, %v1026
        %1028 = vmatmul.bf16.gmra.mxu0 %v816
        %v1029 = vpop.f32.mrf.mxu0
        %v1030 = vadd.f32 %v840, %v1029
        %v1031 = vpop.f32.mrf.mxu0
        %v1032 = vadd.f32 %v840, %v1031
        %1033 = vmatmul.bf16.gmra.mxu0 %v817
        %v1034 = vpop.f32.mrf.mxu0
        %v1035 = vadd.f32 %v840, %v1034
        %v1036 = vpop.f32.mrf.mxu0
        %v1037 = vadd.f32 %v840, %v1036
        %1038 = vmatmul.bf16.gmra.mxu0 %v818
        %v1039 = vpop.f32.mrf.mxu0
        %v1040 = vadd.f32 %v840, %v1039
        %v1041 = vpop.f32.mrf.mxu0
        %v1042 = vadd.f32 %v840, %v1041
        %1043 = vmatmul.bf16.gmra.mxu0 %v819
        %v1044 = vpop.f32.mrf.mxu0
        %v1045 = vadd.f32 %v840, %v1044
        %v1046 = vpop.f32.mrf.mxu0
        %v1047 = vadd.f32 %v840, %v1046
        %1048 = vmatmul.bf16.gmra.mxu0 %v820
        %v1049 = vpop.f32.mrf.mxu0
        %v1050 = vadd.f32 %v840, %v1049
        %v1051 = vpop.f32.mrf.mxu0
        %v1052 = vadd.f32 %v840, %v1051
        %1053 = vmatmul.bf16.gmra.mxu0 %v821
        %v1054 = vpop.f32.mrf.mxu0
        %v1055 = vadd.f32 %v840, %v1054
        %v1056 = vpop.f32.mrf.mxu0
        %v1057 = vadd.f32 %v840, %v1056
        %1058 = vdwg.mxu0
        %1059 = vst [vmem:[%s218] sm:$0xff] %v900
        %1060 = vst [vmem:[%s218 + $0x8] sm:$0xff] %v902
        %1061 = vst [vmem:[%s218 + $0x10] sm:$0xff] %v905
        %1062 = vst [vmem:[%s218 + $0x18] sm:$0xff] %v907
        %1063 = vst [vmem:[%s218 + $0x20] sm:$0xff] %v910
        %1064 = vst [vmem:[%s218 + $0x28] sm:$0xff] %v912
        %1065 = vst [vmem:[%s218 + $0x30] sm:$0xff] %v915
        %1066 = vst [vmem:[%s218 + $0x38] sm:$0xff] %v917
        %1067 = vst [vmem:[%s218 + $0x40] sm:$0xff] %v920
        %1068 = vst [vmem:[%s218 + $0x48] sm:$0xff] %v922
        %1069 = vst [vmem:[%s218 + $0x50] sm:$0xff] %v925
        %1070 = vst [vmem:[%s218 + $0x58] sm:$0xff] %v927
        %1071 = vst [vmem:[%s218 + $0x60] sm:$0xff] %v930
        %1072 = vst [vmem:[%s218 + $0x68] sm:$0xff] %v932
        %1073 = vst [vmem:[%s218 + $0x70] sm:$0xff] %v935
        %1074 = vst [vmem:[%s218 + $0x78] sm:$0xff] %v937
        %1075 = vst [vmem:[%s218 + $0x80] sm:$0xff] %v940
        %1076 = vst [vmem:[%s218 + $0x88] sm:$0xff] %v942
        %1077 = vst [vmem:[%s218 + $0x90] sm:$0xff] %v945
        %1078 = vst [vmem:[%s218 + $0x98] sm:$0xff] %v947
        %1079 = vst [vmem:[%s218 + $0xa0] sm:$0xff] %v950
        %1080 = vst [vmem:[%s218 + $0xa8] sm:$0xff] %v952
        %1081 = vst [vmem:[%s218 + $0xb0] sm:$0xff] %v955
        %1082 = vst [vmem:[%s218 + $0xb8] sm:$0xff] %v957
        %1083 = vst [vmem:[%s218 + $0xc0] sm:$0xff] %v960
        %1084 = vst [vmem:[%s218 + $0xc8] sm:$0xff] %v962
        %1085 = vst [vmem:[%s218 + $0xd0] sm:$0xff] %v965
        %1086 = vst [vmem:[%s218 + $0xd8] sm:$0xff] %v967
        %1087 = vst [vmem:[%s218 + $0xe0] sm:$0xff] %v970
        %1088 = vst [vmem:[%s218 + $0xe8] sm:$0xff] %v972
        %1089 = vst [vmem:[%s218 + $0xf0] sm:$0xff] %v975
        %1090 = vst [vmem:[%s218 + $0xf8] sm:$0xff] %v977
        %1091 = vst [vmem:[%s218 + $0x100] sm:$0xff] %v980
        %1092 = vst [vmem:[%s218 + $0x108] sm:$0xff] %v982
        %1093 = vst [vmem:[%s218 + $0x110] sm:$0xff] %v985
        %1094 = vst [vmem:[%s218 + $0x118] sm:$0xff] %v987
        %1095 = vst [vmem:[%s218 + $0x120] sm:$0xff] %v990
        %1096 = vst [vmem:[%s218 + $0x128] sm:$0xff] %v992
        %1097 = vst [vmem:[%s218 + $0x130] sm:$0xff] %v995
        %1098 = vst [vmem:[%s218 + $0x138] sm:$0xff] %v997
        %1099 = vst [vmem:[%s218 + $0x140] sm:$0xff] %v1000
        %1100 = vst [vmem:[%s218 + $0x148] sm:$0xff] %v1002
        %1101 = vst [vmem:[%s218 + $0x150] sm:$0xff] %v1005
        %1102 = vst [vmem:[%s218 + $0x158] sm:$0xff] %v1007
        %1103 = vst [vmem:[%s218 + $0x160] sm:$0xff] %v1010
        %1104 = vst [vmem:[%s218 + $0x168] sm:$0xff] %v1012
        %1105 = vst [vmem:[%s218 + $0x170] sm:$0xff] %v1015
        %1106 = vst [vmem:[%s218 + $0x178] sm:$0xff] %v1017
        %1107 = vst [vmem:[%s218 + $0x180] sm:$0xff] %v1020
        %1108 = vst [vmem:[%s218 + $0x188] sm:$0xff] %v1022
        %1109 = vst [vmem:[%s218 + $0x190] sm:$0xff] %v1025
        %1110 = vst [vmem:[%s218 + $0x198] sm:$0xff] %v1027
        %1111 = vst [vmem:[%s218 + $0x1a0] sm:$0xff] %v1030
        %1112 = vst [vmem:[%s218 + $0x1a8] sm:$0xff] %v1032
        %1113 = vst [vmem:[%s218 + $0x1b0] sm:$0xff] %v1035
        %1114 = vst [vmem:[%s218 + $0x1b8] sm:$0xff] %v1037
        %1115 = vst [vmem:[%s218 + $0x1c0] sm:$0xff] %v1040
        %1116 = vst [vmem:[%s218 + $0x1c8] sm:$0xff] %v1042
        %1117 = vst [vmem:[%s218 + $0x1d0] sm:$0xff] %v1045
        %1118 = vst [vmem:[%s218 + $0x1d8] sm:$0xff] %v1047
        %1119 = vst [vmem:[%s218 + $0x1e0] sm:$0xff] %v1050
        %1120 = vst [vmem:[%s218 + $0x1e8] sm:$0xff] %v1052
        %1121 = vst [vmem:[%s218 + $0x1f0] sm:$0xff] %v1055
        %1122 = vst [vmem:[%s218 + $0x1f8] sm:$0xff] %v1057
        %s1123 = sand.u32 %s137, 1
        %s1124 = scalar_lea.sflag [#allocation3], %s1123
        %s1125 = sand.u32 %s137, 1
        %s1126 = smul.addr %s1125, 512
        %s1127 = scalar_lea.vmem [#allocation2], %s1126
        // Predicated region
        $region41: #{tpu_custom_call.1} parent=39 // pred_check
          %p1128 = pneg %p147
        $region42: #{tpu_custom_call.1} parent=39 // pred_check_branch
          %1130 = sbr.rel (%p1128) target = $region44
        $region43: #{tpu_custom_call.1} parent=39 // pred_region
          %s1131 = smul.u32 64, %s19
          %1133 = vsyncadd %s1124, 0
          %s1134 = smul.addr %s1131, 8
          %s1135 = scalar_lea.hbm %s5, %s1134
          %s1136 = sshll.u32 %s1127, 4
          %s1137 = int_to_ptr.vmem [resolvable:$true] %s1136
          %s1138 = sshll.u32 %s1135, 4
          %s1139 = int_to_ptr.hbm [resolvable:$true] %s1138
          %1144 = dma.vmem_to_hbm [thread:$0]  %s1137, 8192, %s1139, %s1124, 128, 128, 8
        $region44: #{tpu_custom_call.1} parent=39 // pred_fallthru
          _
      $region40: #{tpu_custom_call.1} parent=5 // pred_fallthru
        _
      %p1145 = scmp.le.s32.totalorder 2, %s14
      // Predicated region
      $region45: #{tpu_custom_call.1} parent=5 // pred_check
        %p1146 = pneg %p1145
      $region46: #{tpu_custom_call.1} parent=5 // pred_check_branch
        %1148 = sbr.rel (%p1146) target = $region48
      $region47: #{tpu_custom_call.1} parent=5 // pred_region
        %s1149 = ssub.s32 %s14, 2
        // Predicated region
        $region49: #{tpu_custom_call.1} parent=47 // pred_check
          %p1150 = pneg %p153
        $region50: #{tpu_custom_call.1} parent=47 // pred_check_branch
          %1152 = sbr.rel (%p1150) target = $region52
        $region51: #{tpu_custom_call.1} parent=47 // pred_region
          %s1153 = sand.u32 %s138, 1
          %s1154 = scalar_lea.sflag [#allocation3], %s1153
          %s1155 = sand.u32 %s138, 1
          %s1156 = smul.addr %s1155, 512
          %s1157 = scalar_lea.vmem [#allocation2], %s1156
          %1159 = dma.done %s1154, 8192
        $region52: #{tpu_custom_call.1} parent=47 // pred_fallthru
          _
      $region48: #{tpu_custom_call.1} parent=5 // pred_fallthru
        _
    $region6: #{tpu_custom_call.1} parent=1 // loop_footer
      %s18 = sadd.s32 1, %s14
    $region7: #{tpu_custom_call.1} parent=1 // loop_footer_branch
      %13 = sbr.rel target = $region3
    $region8: #{tpu_custom_call.1} parent=1 // loop_exit
      _
    %1160 = vsyncpa [#allocation3], 1
    %s1161 = scalar_lea.sflag [#allocation3], 1
    %1162 = vsyncpa %s1161, 1

</llo_original>
